<compile_context>
chip_gen: v7x
topology: tpu7x:2x2x1
jax: 0.10.0
libtpu: 0.0.40
codegen_flags: <defaults>
</compile_context>

<pallas_src>
import functools

import jax
import jax.numpy as jnp
from jax.experimental import pallas as pl
from jax.experimental.pallas import tpu as pltpu


def _crf_forward_kernel(emis_ref, trans_ref, etrans_ref, out_ref, alpha_ref, *,
                        seq_len, t_block, real_tags, start_idx, stop_idx):
    # emis_ref  : (t_block, num_tags, b_sub, 128) VMEM  -- batch on (sublane, lane)
    # trans_ref : (num_tags, num_tags)            SMEM  -- raw transition scalars
    # etrans_ref: (num_tags, num_tags)            SMEM  -- exp(transitions)
    # out_ref   : (b_sub, 128)                    VMEM  -- log partition per lane
    # alpha_ref : (R, b_sub, 128)                 VMEM  -- forward state, persists
    #                                                      across time tiles
    f32 = jnp.float32
    num_real = len(real_tags)
    b_sub = out_ref.shape[0]
    t_blk = pl.program_id(1)

    # Hoist exp(transition) weights for real->real moves as vreg constants,
    # once per tile (JAX does not CSE broadcast_in_dim inside the loop).
    etr = [[jnp.full((b_sub, 128), etrans_ref[ti, tp], dtype=f32)
            for tp in real_tags] for ti in real_tags]

    # First global timestep: only START is live, so (exactly in f32)
    #   alpha[i] = trans[i, START] + emis[0, i].
    @pl.when(t_blk == 0)
    def _():
        for r, tag in enumerate(real_tags):
            alpha_ref[r] = (emis_ref[0, tag].astype(f32)
                            + trans_ref[tag, start_idx])

    # Load the carried forward state once per time tile.
    alpha = [alpha_ref[r] for r in range(num_real)]
    t_base = t_blk * t_block

    # Static unroll over the time tile (t_block is kept small by the wrapper).
    for t_local in range(t_block):
        t_global = t_base + t_local
        # Skip the step that the START-init already consumed (t_global == 0)
        # and any zero-padded steps past the true sequence length.
        valid = jnp.logical_and(t_global >= 1, t_global < seq_len)

        # Shared per-lane max over prev tags (element-wise VPU, no XLU).
        m = alpha[0]
        for a in alpha[1:]:
            m = jnp.maximum(m, a)
        p_exp = [jnp.exp(a - m) for a in alpha]          # R EUP exps / step

        new_alpha = []
        for i, tag in enumerate(real_tags):              # next tag (real only)
            s = p_exp[0] * etr[i][0]
            for p in range(1, num_real):                 # prev tag (real only)
                s = s + p_exp[p] * etr[i][p]
            nv = m + jnp.log(s) + emis_ref[t_local, tag].astype(f32)
            new_alpha.append(jnp.where(valid, nv, alpha[i]))
        alpha = new_alpha

    # Carry the state to the next time tile.
    for r in range(num_real):
        alpha_ref[r] = alpha[r]

    # Terminal transition into STOP_TAG + final log-sum-exp, last tile only.
    @pl.when(t_blk == pl.num_programs(1) - 1)
    def _():
        rows = [alpha[r] + trans_ref[stop_idx, real_tags[r]]
                for r in range(num_real)]
        m2 = rows[0]
        for row in rows[1:]:
            m2 = jnp.maximum(m2, row)
        s2 = jnp.exp(rows[0] - m2)
        for row in rows[1:]:
            s2 = s2 + jnp.exp(row - m2)
        out_ref[...] = m2 + jnp.log(s2)


def crf_forward(emissions, transitions, start_idx, stop_idx, *,
                b_sub=None, t_block=None):
    """Log partition function of a linear-chain CRF, per batch element."""
    batch, seq_len, num_tags = emissions.shape
    assert transitions.shape == (num_tags, num_tags)
    real_tags = tuple(t for t in range(num_tags)
                      if t not in (start_idx, stop_idx))
    assert len(real_tags) >= 1

    lanes = 128
    # ---- batch tiling: (sublane, lane) = (b_sub, 128) tiles ----
    n_sub_total = pl.cdiv(batch, lanes)
    if b_sub is None:
        b_sub = min(8, n_sub_total)
        # Keep >=2 grid blocks when the batch allows it (v7x has 2 TCs).
        while b_sub > 1 and pl.cdiv(n_sub_total, b_sub) < 2:
            b_sub //= 2
    n_sub_total = pl.cdiv(n_sub_total, b_sub) * b_sub
    batch_pad = n_sub_total * lanes
    num_b_blocks = n_sub_total // b_sub

    # ---- time tiling: stream the sequence to bound VMEM (v7x / v5e) ----
    itemsize = jnp.dtype(emissions.dtype).itemsize
    if t_block is None:
        bytes_per_step = num_tags * b_sub * lanes * itemsize
        t_block = int(max(1, min(seq_len, 32,
                                 (2 * 1024 * 1024) // bytes_per_step)))
    num_t_blocks = pl.cdiv(seq_len, t_block)
    seq_pad = num_t_blocks * t_block

    # Layout plumbing (wrapper side): (B, S, T) -> (S, T, n_sub, 128).
    emis_t = jnp.transpose(emissions, (1, 2, 0))
    emis_t = jnp.pad(emis_t, ((0, seq_pad - seq_len), (0, 0),
                              (0, batch_pad - batch)))
    emis_t = emis_t.reshape(seq_pad, num_tags, n_sub_total, lanes)

    trans_f32 = transitions.astype(jnp.float32)
    exp_trans = jnp.exp(trans_f32)

    kernel = functools.partial(
        _crf_forward_kernel,
        seq_len=seq_len,
        t_block=t_block,
        real_tags=real_tags,
        start_idx=start_idx,
        stop_idx=stop_idx,
    )

    out = pl.pallas_call(
        kernel,
        out_shape=jax.ShapeDtypeStruct((n_sub_total, lanes), jnp.float32),
        grid_spec=pltpu.PrefetchScalarGridSpec(
            num_scalar_prefetch=0,
            grid=(num_b_blocks, num_t_blocks),
            in_specs=[
                # One (time-tile, all tags, batch-block) slab per grid step.
                pl.BlockSpec((t_block, num_tags, b_sub, lanes),
                             lambda b, t: (t, 0, b, 0)),
                # Transition tables as SMEM scalars, resident every step.
                pl.BlockSpec(memory_space=pltpu.MemorySpace.SMEM),
                pl.BlockSpec(memory_space=pltpu.MemorySpace.SMEM),
            ],
            out_specs=pl.BlockSpec((b_sub, lanes), lambda b, t: (b, 0)),
            scratch_shapes=[
                pltpu.VMEM((len(real_tags), b_sub, lanes), jnp.float32),
            ],
        ),
        compiler_params=pltpu.CompilerParams(
            dimension_semantics=("parallel", "arbitrary")),
    )(emis_t, trans_f32, exp_trans)
    return out.reshape(-1)[:batch]


def crf_forward_ref(emissions, transitions, start_idx, stop_idx):
    """Pure-JAX reference for validation."""
    batch, seq_len, num_tags = emissions.shape
    alpha = jnp.full((batch, num_tags), -10000.0).at[:, start_idx].set(0.0)
    for t in range(seq_len):
        # scores[b, next, prev] = alpha[b, prev] + trans[next, prev]
        scores = alpha[:, None, :] + transitions[None, :, :]
        alpha = jax.nn.logsumexp(scores, axis=2) + emissions[:, t, :]
    terminal = alpha + transitions[stop_idx][None, :]
    return jax.nn.logsumexp(terminal, axis=1)


if __name__ == "__main__":
    # tag2idx analogous to the PyTorch module's constructor argument.
    tag2idx = {"B-PER": 0, "I-PER": 1, "O": 2, "START_TAG": 3, "STOP_TAG": 4}
    tagset_size = len(tag2idx)
    start_idx = tag2idx["START_TAG"]
    stop_idx = tag2idx["STOP_TAG"]

    batch, seq_len = 2, 8

    key = jax.random.PRNGKey(0)
    k_trans, k_emis = jax.random.split(key)

    # nn.Parameter(torch.randn(T, T)) with START row / STOP column masked.
    transitions = jax.random.normal(k_trans, (tagset_size, tagset_size),
                                    dtype=jnp.float32)
    transitions = transitions.at[start_idx, :].set(-10000.0)
    transitions = transitions.at[:, stop_idx].set(-10000.0)

    # input_features: (batch_size, sequence_length, num_output_dim)
    input_features = jax.random.normal(
        k_emis, (batch, seq_len, tagset_size), dtype=jnp.float32)

    out = crf_forward(input_features, transitions, start_idx, stop_idx)
    out = jax.block_until_ready(out)

    ref = crf_forward_ref(input_features, transitions, start_idx, stop_idx)
    assert out.shape == (batch,)
    assert jnp.allclose(out, ref, rtol=1e-4, atol=1e-4), (out, ref)

    # Second small check exercising batch padding + multiple "parallel" blocks.
    k2 = jax.random.PRNGKey(1)
    feats2 = jax.random.normal(k2, (130, 5, tagset_size), dtype=jnp.float32)
    out2 = jax.block_until_ready(
        crf_forward(feats2, transitions, start_idx, stop_idx))
    ref2 = crf_forward_ref(feats2, transitions, start_idx, stop_idx)
    assert jnp.allclose(out2, ref2, rtol=1e-4, atol=1e-4)

    print("KERNEL_OK")
</pallas_src>

<mosaic_0001>
module attributes {stable_mosaic.version = 11 : i64} {
  func.func @_crf_forward_kernel(%arg0: i32, %arg1: i32, %arg2: memref<8x5x1x128xf32, #tpu.memory_space<vmem>>, %arg3: memref<5x5xf32, #tpu.memory_space<smem>>, %arg4: memref<5x5xf32, #tpu.memory_space<smem>>, %arg5: memref<1x128xf32, #tpu.memory_space<vmem>>, %arg6: memref<3x1x128xf32, #tpu.memory_space<vmem>>) attributes {dimension_semantics = [#tpu.dimension_semantics<parallel>, #tpu.dimension_semantics<arbitrary>], iteration_bounds = array<i64: 1, 1>, scalar_prefetch = 0 : i64, scratch_operands = 1 : i64, tpu.core_type = #tpu.core_type<tc>, window_params = [{transform_indices = @transform_0, window_bounds = array<i64: 8, 5, 1, 128>}, {transform_indices = @transform_1, window_bounds = array<i64: 5, 5>}, {transform_indices = @transform_2, window_bounds = array<i64: 5, 5>}, {transform_indices = @transform_3, window_bounds = array<i64: 1, 128>}]} {
    %c0 = arith.constant 0 : index
    %c0_0 = arith.constant 0 : index
    %0 = memref.load %arg4[%c0, %c0_0] : memref<5x5xf32, #tpu.memory_space<smem>>
    %1 = vector.broadcast %0 : f32 to vector<1x128xf32>
    %c0_1 = arith.constant 0 : index
    %c1 = arith.constant 1 : index
    %2 = memref.load %arg4[%c0_1, %c1] : memref<5x5xf32, #tpu.memory_space<smem>>
    %3 = vector.broadcast %2 : f32 to vector<1x128xf32>
    %c0_2 = arith.constant 0 : index
    %c2 = arith.constant 2 : index
    %4 = memref.load %arg4[%c0_2, %c2] : memref<5x5xf32, #tpu.memory_space<smem>>
    %5 = vector.broadcast %4 : f32 to vector<1x128xf32>
    %c1_3 = arith.constant 1 : index
    %c0_4 = arith.constant 0 : index
    %6 = memref.load %arg4[%c1_3, %c0_4] : memref<5x5xf32, #tpu.memory_space<smem>>
    %7 = vector.broadcast %6 : f32 to vector<1x128xf32>
    %c1_5 = arith.constant 1 : index
    %c1_6 = arith.constant 1 : index
    %8 = memref.load %arg4[%c1_5, %c1_6] : memref<5x5xf32, #tpu.memory_space<smem>>
    %9 = vector.broadcast %8 : f32 to vector<1x128xf32>
    %c1_7 = arith.constant 1 : index
    %c2_8 = arith.constant 2 : index
    %10 = memref.load %arg4[%c1_7, %c2_8] : memref<5x5xf32, #tpu.memory_space<smem>>
    %11 = vector.broadcast %10 : f32 to vector<1x128xf32>
    %c2_9 = arith.constant 2 : index
    %c0_10 = arith.constant 0 : index
    %12 = memref.load %arg4[%c2_9, %c0_10] : memref<5x5xf32, #tpu.memory_space<smem>>
    %13 = vector.broadcast %12 : f32 to vector<1x128xf32>
    %c2_11 = arith.constant 2 : index
    %c1_12 = arith.constant 1 : index
    %14 = memref.load %arg4[%c2_11, %c1_12] : memref<5x5xf32, #tpu.memory_space<smem>>
    %15 = vector.broadcast %14 : f32 to vector<1x128xf32>
    %c2_13 = arith.constant 2 : index
    %c2_14 = arith.constant 2 : index
    %16 = memref.load %arg4[%c2_13, %c2_14] : memref<5x5xf32, #tpu.memory_space<smem>>
    %17 = vector.broadcast %16 : f32 to vector<1x128xf32>
    %c0_i32 = arith.constant 0 : i32
    %18 = arith.cmpi eq, %arg1, %c0_i32 : i32
    %19 = arith.extui %18 : i1 to i32
    %c0_i32_15 = arith.constant 0 : i32
    %20 = arith.cmpi ne, %19, %c0_i32_15 : i32
    scf.if %20 {
      %c0_144 = arith.constant 0 : index
      %c0_145 = arith.constant 0 : index
      %c0_146 = arith.constant 0 : index
      %c0_147 = arith.constant 0 : index
      %400 = vector.load %arg2[%c0_144, %c0_145, %c0_146, %c0_147] : memref<8x5x1x128xf32, #tpu.memory_space<vmem>>, vector<1x1x1x128xf32>
      %401 = vector.shape_cast %400 : vector<1x1x1x128xf32> to vector<1x128xf32>
      %c0_148 = arith.constant 0 : index
      %c3_149 = arith.constant 3 : index
      %402 = memref.load %arg3[%c0_148, %c3_149] : memref<5x5xf32, #tpu.memory_space<smem>>
      %403 = vector.broadcast %402 : f32 to vector<1x128xf32>
      %404 = arith.addf %401, %403 : vector<1x128xf32>
      %c0_150 = arith.constant 0 : index
      %c0_151 = arith.constant 0 : index
      %c0_152 = arith.constant 0 : index
      %405 = vector.load %arg6[%c0_150, %c0_151, %c0_152] : memref<3x1x128xf32, #tpu.memory_space<vmem>>, vector<1x1x128xf32>
      %406 = vector.shape_cast %405 : vector<1x1x128xf32> to vector<1x128xf32>
      %407 = vector.shape_cast %404 : vector<1x128xf32> to vector<1x1x128xf32>
      tpu.vector_store %arg6[%c0_150, %c0_151, %c0_152], %407 {strides = array<i32>} : memref<3x1x128xf32, #tpu.memory_space<vmem>>, vector<1x1x128xf32>,
      %c0_153 = arith.constant 0 : index
      %c1_154 = arith.constant 1 : index
      %c0_155 = arith.constant 0 : index
      %c0_156 = arith.constant 0 : index
      %408 = vector.load %arg2[%c0_153, %c1_154, %c0_155, %c0_156] : memref<8x5x1x128xf32, #tpu.memory_space<vmem>>, vector<1x1x1x128xf32>
      %409 = vector.shape_cast %408 : vector<1x1x1x128xf32> to vector<1x128xf32>
      %c1_157 = arith.constant 1 : index
      %c3_158 = arith.constant 3 : index
      %410 = memref.load %arg3[%c1_157, %c3_158] : memref<5x5xf32, #tpu.memory_space<smem>>
      %411 = vector.broadcast %410 : f32 to vector<1x128xf32>
      %412 = arith.addf %409, %411 : vector<1x128xf32>
      %c1_159 = arith.constant 1 : index
      %c0_160 = arith.constant 0 : index
      %c0_161 = arith.constant 0 : index
      %413 = vector.load %arg6[%c1_159, %c0_160, %c0_161] : memref<3x1x128xf32, #tpu.memory_space<vmem>>, vector<1x1x128xf32>
      %414 = vector.shape_cast %413 : vector<1x1x128xf32> to vector<1x128xf32>
      %415 = vector.shape_cast %412 : vector<1x128xf32> to vector<1x1x128xf32>
      tpu.vector_store %arg6[%c1_159, %c0_160, %c0_161], %415 {strides = array<i32>} : memref<3x1x128xf32, #tpu.memory_space<vmem>>, vector<1x1x128xf32>,
      %c0_162 = arith.constant 0 : index
      %c2_163 = arith.constant 2 : index
      %c0_164 = arith.constant 0 : index
      %c0_165 = arith.constant 0 : index
      %416 = vector.load %arg2[%c0_162, %c2_163, %c0_164, %c0_165] : memref<8x5x1x128xf32, #tpu.memory_space<vmem>>, vector<1x1x1x128xf32>
      %417 = vector.shape_cast %416 : vector<1x1x1x128xf32> to vector<1x128xf32>
      %c2_166 = arith.constant 2 : index
      %c3_167 = arith.constant 3 : index
      %418 = memref.load %arg3[%c2_166, %c3_167] : memref<5x5xf32, #tpu.memory_space<smem>>
      %419 = vector.broadcast %418 : f32 to vector<1x128xf32>
      %420 = arith.addf %417, %419 : vector<1x128xf32>
      %c2_168 = arith.constant 2 : index
      %c0_169 = arith.constant 0 : index
      %c0_170 = arith.constant 0 : index
      %421 = vector.load %arg6[%c2_168, %c0_169, %c0_170] : memref<3x1x128xf32, #tpu.memory_space<vmem>>, vector<1x1x128xf32>
      %422 = vector.shape_cast %421 : vector<1x1x128xf32> to vector<1x128xf32>
      %423 = vector.shape_cast %420 : vector<1x128xf32> to vector<1x1x128xf32>
      tpu.vector_store %arg6[%c2_168, %c0_169, %c0_170], %423 {strides = array<i32>} : memref<3x1x128xf32, #tpu.memory_space<vmem>>, vector<1x1x128xf32>,
    } else {
    }
    %c0_16 = arith.constant 0 : index
    %c0_17 = arith.constant 0 : index
    %c0_18 = arith.constant 0 : index
    %21 = vector.load %arg6[%c0_16, %c0_17, %c0_18] : memref<3x1x128xf32, #tpu.memory_space<vmem>>, vector<1x1x128xf32>
    %22 = vector.shape_cast %21 : vector<1x1x128xf32> to vector<1x128xf32>
    %c1_19 = arith.constant 1 : index
    %c0_20 = arith.constant 0 : index
    %c0_21 = arith.constant 0 : index
    %23 = vector.load %arg6[%c1_19, %c0_20, %c0_21] : memref<3x1x128xf32, #tpu.memory_space<vmem>>, vector<1x1x128xf32>
    %24 = vector.shape_cast %23 : vector<1x1x128xf32> to vector<1x128xf32>
    %c2_22 = arith.constant 2 : index
    %c0_23 = arith.constant 0 : index
    %c0_24 = arith.constant 0 : index
    %25 = vector.load %arg6[%c2_22, %c0_23, %c0_24] : memref<3x1x128xf32, #tpu.memory_space<vmem>>, vector<1x1x128xf32>
    %26 = vector.shape_cast %25 : vector<1x1x128xf32> to vector<1x128xf32>
    %c8_i32 = arith.constant 8 : i32
    %27 = arith.muli %arg1, %c8_i32 : i32
    %c0_i32_25 = arith.constant 0 : i32
    %28 = arith.addi %27, %c0_i32_25 : i32
    %c1_i32 = arith.constant 1 : i32
    %29 = arith.cmpi sge, %28, %c1_i32 : i32
    %c8_i32_26 = arith.constant 8 : i32
    %30 = arith.cmpi slt, %28, %c8_i32_26 : i32
    %31 = arith.andi %29, %30 : i1
    %32 = arith.maximumf %22, %24 : vector<1x128xf32>
    %33 = arith.maximumf %32, %26 : vector<1x128xf32>
    %34 = arith.subf %22, %33 : vector<1x128xf32>
    %35 = math.exp %34 : vector<1x128xf32>
    %36 = arith.subf %24, %33 : vector<1x128xf32>
    %37 = math.exp %36 : vector<1x128xf32>
    %38 = arith.subf %26, %33 : vector<1x128xf32>
    %39 = math.exp %38 : vector<1x128xf32>
    %40 = arith.mulf %35, %1 : vector<1x128xf32>
    %41 = arith.mulf %37, %3 : vector<1x128xf32>
    %42 = arith.addf %40, %41 : vector<1x128xf32>
    %43 = arith.mulf %39, %5 : vector<1x128xf32>
    %44 = arith.addf %42, %43 : vector<1x128xf32>
    %45 = math.log %44 : vector<1x128xf32>
    %46 = arith.addf %33, %45 : vector<1x128xf32>
    %c0_27 = arith.constant 0 : index
    %c0_28 = arith.constant 0 : index
    %c0_29 = arith.constant 0 : index
    %c0_30 = arith.constant 0 : index
    %47 = vector.load %arg2[%c0_27, %c0_28, %c0_29, %c0_30] : memref<8x5x1x128xf32, #tpu.memory_space<vmem>>, vector<1x1x1x128xf32>
    %48 = vector.shape_cast %47 : vector<1x1x1x128xf32> to vector<1x128xf32>
    %49 = arith.addf %46, %48 : vector<1x128xf32>
    %50 = arith.select %31, %49, %22 : vector<1x128xf32>
    %51 = arith.mulf %35, %7 : vector<1x128xf32>
    %52 = arith.mulf %37, %9 : vector<1x128xf32>
    %53 = arith.addf %51, %52 : vector<1x128xf32>
    %54 = arith.mulf %39, %11 : vector<1x128xf32>
    %55 = arith.addf %53, %54 : vector<1x128xf32>
    %56 = math.log %55 : vector<1x128xf32>
    %57 = arith.addf %33, %56 : vector<1x128xf32>
    %c0_31 = arith.constant 0 : index
    %c1_32 = arith.constant 1 : index
    %c0_33 = arith.constant 0 : index
    %c0_34 = arith.constant 0 : index
    %58 = vector.load %arg2[%c0_31, %c1_32, %c0_33, %c0_34] : memref<8x5x1x128xf32, #tpu.memory_space<vmem>>, vector<1x1x1x128xf32>
    %59 = vector.shape_cast %58 : vector<1x1x1x128xf32> to vector<1x128xf32>
    %60 = arith.addf %57, %59 : vector<1x128xf32>
    %61 = arith.select %31, %60, %24 : vector<1x128xf32>
    %62 = arith.mulf %35, %13 : vector<1x128xf32>
    %63 = arith.mulf %37, %15 : vector<1x128xf32>
    %64 = arith.addf %62, %63 : vector<1x128xf32>
    %65 = arith.mulf %39, %17 : vector<1x128xf32>
    %66 = arith.addf %64, %65 : vector<1x128xf32>
    %67 = math.log %66 : vector<1x128xf32>
    %68 = arith.addf %33, %67 : vector<1x128xf32>
    %c0_35 = arith.constant 0 : index
    %c2_36 = arith.constant 2 : index
    %c0_37 = arith.constant 0 : index
    %c0_38 = arith.constant 0 : index
    %69 = vector.load %arg2[%c0_35, %c2_36, %c0_37, %c0_38] : memref<8x5x1x128xf32, #tpu.memory_space<vmem>>, vector<1x1x1x128xf32>
    %70 = vector.shape_cast %69 : vector<1x1x1x128xf32> to vector<1x128xf32>
    %71 = arith.addf %68, %70 : vector<1x128xf32>
    %72 = arith.select %31, %71, %26 : vector<1x128xf32>
    %c1_i32_39 = arith.constant 1 : i32
    %73 = arith.addi %27, %c1_i32_39 : i32
    %c1_i32_40 = arith.constant 1 : i32
    %74 = arith.cmpi sge, %73, %c1_i32_40 : i32
    %c8_i32_41 = arith.constant 8 : i32
    %75 = arith.cmpi slt, %73, %c8_i32_41 : i32
    %76 = arith.andi %74, %75 : i1
    %77 = arith.maximumf %50, %61 : vector<1x128xf32>
    %78 = arith.maximumf %77, %72 : vector<1x128xf32>
    %79 = arith.subf %50, %78 : vector<1x128xf32>
    %80 = math.exp %79 : vector<1x128xf32>
    %81 = arith.subf %61, %78 : vector<1x128xf32>
    %82 = math.exp %81 : vector<1x128xf32>
    %83 = arith.subf %72, %78 : vector<1x128xf32>
    %84 = math.exp %83 : vector<1x128xf32>
    %85 = arith.mulf %80, %1 : vector<1x128xf32>
    %86 = arith.mulf %82, %3 : vector<1x128xf32>
    %87 = arith.addf %85, %86 : vector<1x128xf32>
    %88 = arith.mulf %84, %5 : vector<1x128xf32>
    %89 = arith.addf %87, %88 : vector<1x128xf32>
    %90 = math.log %89 : vector<1x128xf32>
    %91 = arith.addf %78, %90 : vector<1x128xf32>
    %c1_42 = arith.constant 1 : index
    %c0_43 = arith.constant 0 : index
    %c0_44 = arith.constant 0 : index
    %c0_45 = arith.constant 0 : index
    %92 = vector.load %arg2[%c1_42, %c0_43, %c0_44, %c0_45] : memref<8x5x1x128xf32, #tpu.memory_space<vmem>>, vector<1x1x1x128xf32>
    %93 = vector.shape_cast %92 : vector<1x1x1x128xf32> to vector<1x128xf32>
    %94 = arith.addf %91, %93 : vector<1x128xf32>
    %95 = arith.select %76, %94, %50 : vector<1x128xf32>
    %96 = arith.mulf %80, %7 : vector<1x128xf32>
    %97 = arith.mulf %82, %9 : vector<1x128xf32>
    %98 = arith.addf %96, %97 : vector<1x128xf32>
    %99 = arith.mulf %84, %11 : vector<1x128xf32>
    %100 = arith.addf %98, %99 : vector<1x128xf32>
    %101 = math.log %100 : vector<1x128xf32>
    %102 = arith.addf %78, %101 : vector<1x128xf32>
    %c1_46 = arith.constant 1 : index
    %c1_47 = arith.constant 1 : index
    %c0_48 = arith.constant 0 : index
    %c0_49 = arith.constant 0 : index
    %103 = vector.load %arg2[%c1_46, %c1_47, %c0_48, %c0_49] : memref<8x5x1x128xf32, #tpu.memory_space<vmem>>, vector<1x1x1x128xf32>
    %104 = vector.shape_cast %103 : vector<1x1x1x128xf32> to vector<1x128xf32>
    %105 = arith.addf %102, %104 : vector<1x128xf32>
    %106 = arith.select %76, %105, %61 : vector<1x128xf32>
    %107 = arith.mulf %80, %13 : vector<1x128xf32>
    %108 = arith.mulf %82, %15 : vector<1x128xf32>
    %109 = arith.addf %107, %108 : vector<1x128xf32>
    %110 = arith.mulf %84, %17 : vector<1x128xf32>
    %111 = arith.addf %109, %110 : vector<1x128xf32>
    %112 = math.log %111 : vector<1x128xf32>
    %113 = arith.addf %78, %112 : vector<1x128xf32>
    %c1_50 = arith.constant 1 : index
    %c2_51 = arith.constant 2 : index
    %c0_52 = arith.constant 0 : index
    %c0_53 = arith.constant 0 : index
    %114 = vector.load %arg2[%c1_50, %c2_51, %c0_52, %c0_53] : memref<8x5x1x128xf32, #tpu.memory_space<vmem>>, vector<1x1x1x128xf32>
    %115 = vector.shape_cast %114 : vector<1x1x1x128xf32> to vector<1x128xf32>
    %116 = arith.addf %113, %115 : vector<1x128xf32>
    %117 = arith.select %76, %116, %72 : vector<1x128xf32>
    %c2_i32 = arith.constant 2 : i32
    %118 = arith.addi %27, %c2_i32 : i32
    %c1_i32_54 = arith.constant 1 : i32
    %119 = arith.cmpi sge, %118, %c1_i32_54 : i32
    %c8_i32_55 = arith.constant 8 : i32
    %120 = arith.cmpi slt, %118, %c8_i32_55 : i32
    %121 = arith.andi %119, %120 : i1
    %122 = arith.maximumf %95, %106 : vector<1x128xf32>
    %123 = arith.maximumf %122, %117 : vector<1x128xf32>
    %124 = arith.subf %95, %123 : vector<1x128xf32>
    %125 = math.exp %124 : vector<1x128xf32>
    %126 = arith.subf %106, %123 : vector<1x128xf32>
    %127 = math.exp %126 : vector<1x128xf32>
    %128 = arith.subf %117, %123 : vector<1x128xf32>
    %129 = math.exp %128 : vector<1x128xf32>
    %130 = arith.mulf %125, %1 : vector<1x128xf32>
    %131 = arith.mulf %127, %3 : vector<1x128xf32>
    %132 = arith.addf %130, %131 : vector<1x128xf32>
    %133 = arith.mulf %129, %5 : vector<1x128xf32>
    %134 = arith.addf %132, %133 : vector<1x128xf32>
    %135 = math.log %134 : vector<1x128xf32>
    %136 = arith.addf %123, %135 : vector<1x128xf32>
    %c2_56 = arith.constant 2 : index
    %c0_57 = arith.constant 0 : index
    %c0_58 = arith.constant 0 : index
    %c0_59 = arith.constant 0 : index
    %137 = vector.load %arg2[%c2_56, %c0_57, %c0_58, %c0_59] : memref<8x5x1x128xf32, #tpu.memory_space<vmem>>, vector<1x1x1x128xf32>
    %138 = vector.shape_cast %137 : vector<1x1x1x128xf32> to vector<1x128xf32>
    %139 = arith.addf %136, %138 : vector<1x128xf32>
    %140 = arith.select %121, %139, %95 : vector<1x128xf32>
    %141 = arith.mulf %125, %7 : vector<1x128xf32>
    %142 = arith.mulf %127, %9 : vector<1x128xf32>
    %143 = arith.addf %141, %142 : vector<1x128xf32>
    %144 = arith.mulf %129, %11 : vector<1x128xf32>
    %145 = arith.addf %143, %144 : vector<1x128xf32>
    %146 = math.log %145 : vector<1x128xf32>
    %147 = arith.addf %123, %146 : vector<1x128xf32>
    %c2_60 = arith.constant 2 : index
    %c1_61 = arith.constant 1 : index
    %c0_62 = arith.constant 0 : index
    %c0_63 = arith.constant 0 : index
    %148 = vector.load %arg2[%c2_60, %c1_61, %c0_62, %c0_63] : memref<8x5x1x128xf32, #tpu.memory_space<vmem>>, vector<1x1x1x128xf32>
    %149 = vector.shape_cast %148 : vector<1x1x1x128xf32> to vector<1x128xf32>
    %150 = arith.addf %147, %149 : vector<1x128xf32>
    %151 = arith.select %121, %150, %106 : vector<1x128xf32>
    %152 = arith.mulf %125, %13 : vector<1x128xf32>
    %153 = arith.mulf %127, %15 : vector<1x128xf32>
    %154 = arith.addf %152, %153 : vector<1x128xf32>
    %155 = arith.mulf %129, %17 : vector<1x128xf32>
    %156 = arith.addf %154, %155 : vector<1x128xf32>
    %157 = math.log %156 : vector<1x128xf32>
    %158 = arith.addf %123, %157 : vector<1x128xf32>
    %c2_64 = arith.constant 2 : index
    %c2_65 = arith.constant 2 : index
    %c0_66 = arith.constant 0 : index
    %c0_67 = arith.constant 0 : index
    %159 = vector.load %arg2[%c2_64, %c2_65, %c0_66, %c0_67] : memref<8x5x1x128xf32, #tpu.memory_space<vmem>>, vector<1x1x1x128xf32>
    %160 = vector.shape_cast %159 : vector<1x1x1x128xf32> to vector<1x128xf32>
    %161 = arith.addf %158, %160 : vector<1x128xf32>
    %162 = arith.select %121, %161, %117 : vector<1x128xf32>
    %c3_i32 = arith.constant 3 : i32
    %163 = arith.addi %27, %c3_i32 : i32
    %c1_i32_68 = arith.constant 1 : i32
    %164 = arith.cmpi sge, %163, %c1_i32_68 : i32
    %c8_i32_69 = arith.constant 8 : i32
    %165 = arith.cmpi slt, %163, %c8_i32_69 : i32
    %166 = arith.andi %164, %165 : i1
    %167 = arith.maximumf %140, %151 : vector<1x128xf32>
    %168 = arith.maximumf %167, %162 : vector<1x128xf32>
    %169 = arith.subf %140, %168 : vector<1x128xf32>
    %170 = math.exp %169 : vector<1x128xf32>
    %171 = arith.subf %151, %168 : vector<1x128xf32>
    %172 = math.exp %171 : vector<1x128xf32>
    %173 = arith.subf %162, %168 : vector<1x128xf32>
    %174 = math.exp %173 : vector<1x128xf32>
    %175 = arith.mulf %170, %1 : vector<1x128xf32>
    %176 = arith.mulf %172, %3 : vector<1x128xf32>
    %177 = arith.addf %175, %176 : vector<1x128xf32>
    %178 = arith.mulf %174, %5 : vector<1x128xf32>
    %179 = arith.addf %177, %178 : vector<1x128xf32>
    %180 = math.log %179 : vector<1x128xf32>
    %181 = arith.addf %168, %180 : vector<1x128xf32>
    %c3 = arith.constant 3 : index
    %c0_70 = arith.constant 0 : index
    %c0_71 = arith.constant 0 : index
    %c0_72 = arith.constant 0 : index
    %182 = vector.load %arg2[%c3, %c0_70, %c0_71, %c0_72] : memref<8x5x1x128xf32, #tpu.memory_space<vmem>>, vector<1x1x1x128xf32>
    %183 = vector.shape_cast %182 : vector<1x1x1x128xf32> to vector<1x128xf32>
    %184 = arith.addf %181, %183 : vector<1x128xf32>
    %185 = arith.select %166, %184, %140 : vector<1x128xf32>
    %186 = arith.mulf %170, %7 : vector<1x128xf32>
    %187 = arith.mulf %172, %9 : vector<1x128xf32>
    %188 = arith.addf %186, %187 : vector<1x128xf32>
    %189 = arith.mulf %174, %11 : vector<1x128xf32>
    %190 = arith.addf %188, %189 : vector<1x128xf32>
    %191 = math.log %190 : vector<1x128xf32>
    %192 = arith.addf %168, %191 : vector<1x128xf32>
    %c3_73 = arith.constant 3 : index
    %c1_74 = arith.constant 1 : index
    %c0_75 = arith.constant 0 : index
    %c0_76 = arith.constant 0 : index
    %193 = vector.load %arg2[%c3_73, %c1_74, %c0_75, %c0_76] : memref<8x5x1x128xf32, #tpu.memory_space<vmem>>, vector<1x1x1x128xf32>
    %194 = vector.shape_cast %193 : vector<1x1x1x128xf32> to vector<1x128xf32>
    %195 = arith.addf %192, %194 : vector<1x128xf32>
    %196 = arith.select %166, %195, %151 : vector<1x128xf32>
    %197 = arith.mulf %170, %13 : vector<1x128xf32>
    %198 = arith.mulf %172, %15 : vector<1x128xf32>
    %199 = arith.addf %197, %198 : vector<1x128xf32>
    %200 = arith.mulf %174, %17 : vector<1x128xf32>
    %201 = arith.addf %199, %200 : vector<1x128xf32>
    %202 = math.log %201 : vector<1x128xf32>
    %203 = arith.addf %168, %202 : vector<1x128xf32>
    %c3_77 = arith.constant 3 : index
    %c2_78 = arith.constant 2 : index
    %c0_79 = arith.constant 0 : index
    %c0_80 = arith.constant 0 : index
    %204 = vector.load %arg2[%c3_77, %c2_78, %c0_79, %c0_80] : memref<8x5x1x128xf32, #tpu.memory_space<vmem>>, vector<1x1x1x128xf32>
    %205 = vector.shape_cast %204 : vector<1x1x1x128xf32> to vector<1x128xf32>
    %206 = arith.addf %203, %205 : vector<1x128xf32>
    %207 = arith.select %166, %206, %162 : vector<1x128xf32>
    %c4_i32 = arith.constant 4 : i32
    %208 = arith.addi %27, %c4_i32 : i32
    %c1_i32_81 = arith.constant 1 : i32
    %209 = arith.cmpi sge, %208, %c1_i32_81 : i32
    %c8_i32_82 = arith.constant 8 : i32
    %210 = arith.cmpi slt, %208, %c8_i32_82 : i32
    %211 = arith.andi %209, %210 : i1
    %212 = arith.maximumf %185, %196 : vector<1x128xf32>
    %213 = arith.maximumf %212, %207 : vector<1x128xf32>
    %214 = arith.subf %185, %213 : vector<1x128xf32>
    %215 = math.exp %214 : vector<1x128xf32>
    %216 = arith.subf %196, %213 : vector<1x128xf32>
    %217 = math.exp %216 : vector<1x128xf32>
    %218 = arith.subf %207, %213 : vector<1x128xf32>
    %219 = math.exp %218 : vector<1x128xf32>
    %220 = arith.mulf %215, %1 : vector<1x128xf32>
    %221 = arith.mulf %217, %3 : vector<1x128xf32>
    %222 = arith.addf %220, %221 : vector<1x128xf32>
    %223 = arith.mulf %219, %5 : vector<1x128xf32>
    %224 = arith.addf %222, %223 : vector<1x128xf32>
    %225 = math.log %224 : vector<1x128xf32>
    %226 = arith.addf %213, %225 : vector<1x128xf32>
    %c4 = arith.constant 4 : index
    %c0_83 = arith.constant 0 : index
    %c0_84 = arith.constant 0 : index
    %c0_85 = arith.constant 0 : index
    %227 = vector.load %arg2[%c4, %c0_83, %c0_84, %c0_85] : memref<8x5x1x128xf32, #tpu.memory_space<vmem>>, vector<1x1x1x128xf32>
    %228 = vector.shape_cast %227 : vector<1x1x1x128xf32> to vector<1x128xf32>
    %229 = arith.addf %226, %228 : vector<1x128xf32>
    %230 = arith.select %211, %229, %185 : vector<1x128xf32>
    %231 = arith.mulf %215, %7 : vector<1x128xf32>
    %232 = arith.mulf %217, %9 : vector<1x128xf32>
    %233 = arith.addf %231, %232 : vector<1x128xf32>
    %234 = arith.mulf %219, %11 : vector<1x128xf32>
    %235 = arith.addf %233, %234 : vector<1x128xf32>
    %236 = math.log %235 : vector<1x128xf32>
    %237 = arith.addf %213, %236 : vector<1x128xf32>
    %c4_86 = arith.constant 4 : index
    %c1_87 = arith.constant 1 : index
    %c0_88 = arith.constant 0 : index
    %c0_89 = arith.constant 0 : index
    %238 = vector.load %arg2[%c4_86, %c1_87, %c0_88, %c0_89] : memref<8x5x1x128xf32, #tpu.memory_space<vmem>>, vector<1x1x1x128xf32>
    %239 = vector.shape_cast %238 : vector<1x1x1x128xf32> to vector<1x128xf32>
    %240 = arith.addf %237, %239 : vector<1x128xf32>
    %241 = arith.select %211, %240, %196 : vector<1x128xf32>
    %242 = arith.mulf %215, %13 : vector<1x128xf32>
    %243 = arith.mulf %217, %15 : vector<1x128xf32>
    %244 = arith.addf %242, %243 : vector<1x128xf32>
    %245 = arith.mulf %219, %17 : vector<1x128xf32>
    %246 = arith.addf %244, %245 : vector<1x128xf32>
    %247 = math.log %246 : vector<1x128xf32>
    %248 = arith.addf %213, %247 : vector<1x128xf32>
    %c4_90 = arith.constant 4 : index
    %c2_91 = arith.constant 2 : index
    %c0_92 = arith.constant 0 : index
    %c0_93 = arith.constant 0 : index
    %249 = vector.load %arg2[%c4_90, %c2_91, %c0_92, %c0_93] : memref<8x5x1x128xf32, #tpu.memory_space<vmem>>, vector<1x1x1x128xf32>
    %250 = vector.shape_cast %249 : vector<1x1x1x128xf32> to vector<1x128xf32>
    %251 = arith.addf %248, %250 : vector<1x128xf32>
    %252 = arith.select %211, %251, %207 : vector<1x128xf32>
    %c5_i32 = arith.constant 5 : i32
    %253 = arith.addi %27, %c5_i32 : i32
    %c1_i32_94 = arith.constant 1 : i32
    %254 = arith.cmpi sge, %253, %c1_i32_94 : i32
    %c8_i32_95 = arith.constant 8 : i32
    %255 = arith.cmpi slt, %253, %c8_i32_95 : i32
    %256 = arith.andi %254, %255 : i1
    %257 = arith.maximumf %230, %241 : vector<1x128xf32>
    %258 = arith.maximumf %257, %252 : vector<1x128xf32>
    %259 = arith.subf %230, %258 : vector<1x128xf32>
    %260 = math.exp %259 : vector<1x128xf32>
    %261 = arith.subf %241, %258 : vector<1x128xf32>
    %262 = math.exp %261 : vector<1x128xf32>
    %263 = arith.subf %252, %258 : vector<1x128xf32>
    %264 = math.exp %263 : vector<1x128xf32>
    %265 = arith.mulf %260, %1 : vector<1x128xf32>
    %266 = arith.mulf %262, %3 : vector<1x128xf32>
    %267 = arith.addf %265, %266 : vector<1x128xf32>
    %268 = arith.mulf %264, %5 : vector<1x128xf32>
    %269 = arith.addf %267, %268 : vector<1x128xf32>
    %270 = math.log %269 : vector<1x128xf32>
    %271 = arith.addf %258, %270 : vector<1x128xf32>
    %c5 = arith.constant 5 : index
    %c0_96 = arith.constant 0 : index
    %c0_97 = arith.constant 0 : index
    %c0_98 = arith.constant 0 : index
    %272 = vector.load %arg2[%c5, %c0_96, %c0_97, %c0_98] : memref<8x5x1x128xf32, #tpu.memory_space<vmem>>, vector<1x1x1x128xf32>
    %273 = vector.shape_cast %272 : vector<1x1x1x128xf32> to vector<1x128xf32>
    %274 = arith.addf %271, %273 : vector<1x128xf32>
    %275 = arith.select %256, %274, %230 : vector<1x128xf32>
    %276 = arith.mulf %260, %7 : vector<1x128xf32>
    %277 = arith.mulf %262, %9 : vector<1x128xf32>
    %278 = arith.addf %276, %277 : vector<1x128xf32>
    %279 = arith.mulf %264, %11 : vector<1x128xf32>
    %280 = arith.addf %278, %279 : vector<1x128xf32>
    %281 = math.log %280 : vector<1x128xf32>
    %282 = arith.addf %258, %281 : vector<1x128xf32>
    %c5_99 = arith.constant 5 : index
    %c1_100 = arith.constant 1 : index
    %c0_101 = arith.constant 0 : index
    %c0_102 = arith.constant 0 : index
    %283 = vector.load %arg2[%c5_99, %c1_100, %c0_101, %c0_102] : memref<8x5x1x128xf32, #tpu.memory_space<vmem>>, vector<1x1x1x128xf32>
    %284 = vector.shape_cast %283 : vector<1x1x1x128xf32> to vector<1x128xf32>
    %285 = arith.addf %282, %284 : vector<1x128xf32>
    %286 = arith.select %256, %285, %241 : vector<1x128xf32>
    %287 = arith.mulf %260, %13 : vector<1x128xf32>
    %288 = arith.mulf %262, %15 : vector<1x128xf32>
    %289 = arith.addf %287, %288 : vector<1x128xf32>
    %290 = arith.mulf %264, %17 : vector<1x128xf32>
    %291 = arith.addf %289, %290 : vector<1x128xf32>
    %292 = math.log %291 : vector<1x128xf32>
    %293 = arith.addf %258, %292 : vector<1x128xf32>
    %c5_103 = arith.constant 5 : index
    %c2_104 = arith.constant 2 : index
    %c0_105 = arith.constant 0 : index
    %c0_106 = arith.constant 0 : index
    %294 = vector.load %arg2[%c5_103, %c2_104, %c0_105, %c0_106] : memref<8x5x1x128xf32, #tpu.memory_space<vmem>>, vector<1x1x1x128xf32>
    %295 = vector.shape_cast %294 : vector<1x1x1x128xf32> to vector<1x128xf32>
    %296 = arith.addf %293, %295 : vector<1x128xf32>
    %297 = arith.select %256, %296, %252 : vector<1x128xf32>
    %c6_i32 = arith.constant 6 : i32
    %298 = arith.addi %27, %c6_i32 : i32
    %c1_i32_107 = arith.constant 1 : i32
    %299 = arith.cmpi sge, %298, %c1_i32_107 : i32
    %c8_i32_108 = arith.constant 8 : i32
    %300 = arith.cmpi slt, %298, %c8_i32_108 : i32
    %301 = arith.andi %299, %300 : i1
    %302 = arith.maximumf %275, %286 : vector<1x128xf32>
    %303 = arith.maximumf %302, %297 : vector<1x128xf32>
    %304 = arith.subf %275, %303 : vector<1x128xf32>
    %305 = math.exp %304 : vector<1x128xf32>
    %306 = arith.subf %286, %303 : vector<1x128xf32>
    %307 = math.exp %306 : vector<1x128xf32>
    %308 = arith.subf %297, %303 : vector<1x128xf32>
    %309 = math.exp %308 : vector<1x128xf32>
    %310 = arith.mulf %305, %1 : vector<1x128xf32>
    %311 = arith.mulf %307, %3 : vector<1x128xf32>
    %312 = arith.addf %310, %311 : vector<1x128xf32>
    %313 = arith.mulf %309, %5 : vector<1x128xf32>
    %314 = arith.addf %312, %313 : vector<1x128xf32>
    %315 = math.log %314 : vector<1x128xf32>
    %316 = arith.addf %303, %315 : vector<1x128xf32>
    %c6 = arith.constant 6 : index
    %c0_109 = arith.constant 0 : index
    %c0_110 = arith.constant 0 : index
    %c0_111 = arith.constant 0 : index
    %317 = vector.load %arg2[%c6, %c0_109, %c0_110, %c0_111] : memref<8x5x1x128xf32, #tpu.memory_space<vmem>>, vector<1x1x1x128xf32>
    %318 = vector.shape_cast %317 : vector<1x1x1x128xf32> to vector<1x128xf32>
    %319 = arith.addf %316, %318 : vector<1x128xf32>
    %320 = arith.select %301, %319, %275 : vector<1x128xf32>
    %321 = arith.mulf %305, %7 : vector<1x128xf32>
    %322 = arith.mulf %307, %9 : vector<1x128xf32>
    %323 = arith.addf %321, %322 : vector<1x128xf32>
    %324 = arith.mulf %309, %11 : vector<1x128xf32>
    %325 = arith.addf %323, %324 : vector<1x128xf32>
    %326 = math.log %325 : vector<1x128xf32>
    %327 = arith.addf %303, %326 : vector<1x128xf32>
    %c6_112 = arith.constant 6 : index
    %c1_113 = arith.constant 1 : index
    %c0_114 = arith.constant 0 : index
    %c0_115 = arith.constant 0 : index
    %328 = vector.load %arg2[%c6_112, %c1_113, %c0_114, %c0_115] : memref<8x5x1x128xf32, #tpu.memory_space<vmem>>, vector<1x1x1x128xf32>
    %329 = vector.shape_cast %328 : vector<1x1x1x128xf32> to vector<1x128xf32>
    %330 = arith.addf %327, %329 : vector<1x128xf32>
    %331 = arith.select %301, %330, %286 : vector<1x128xf32>
    %332 = arith.mulf %305, %13 : vector<1x128xf32>
    %333 = arith.mulf %307, %15 : vector<1x128xf32>
    %334 = arith.addf %332, %333 : vector<1x128xf32>
    %335 = arith.mulf %309, %17 : vector<1x128xf32>
    %336 = arith.addf %334, %335 : vector<1x128xf32>
    %337 = math.log %336 : vector<1x128xf32>
    %338 = arith.addf %303, %337 : vector<1x128xf32>
    %c6_116 = arith.constant 6 : index
    %c2_117 = arith.constant 2 : index
    %c0_118 = arith.constant 0 : index
    %c0_119 = arith.constant 0 : index
    %339 = vector.load %arg2[%c6_116, %c2_117, %c0_118, %c0_119] : memref<8x5x1x128xf32, #tpu.memory_space<vmem>>, vector<1x1x1x128xf32>
    %340 = vector.shape_cast %339 : vector<1x1x1x128xf32> to vector<1x128xf32>
    %341 = arith.addf %338, %340 : vector<1x128xf32>
    %342 = arith.select %301, %341, %297 : vector<1x128xf32>
    %c7_i32 = arith.constant 7 : i32
    %343 = arith.addi %27, %c7_i32 : i32
    %c1_i32_120 = arith.constant 1 : i32
    %344 = arith.cmpi sge, %343, %c1_i32_120 : i32
    %c8_i32_121 = arith.constant 8 : i32
    %345 = arith.cmpi slt, %343, %c8_i32_121 : i32
    %346 = arith.andi %344, %345 : i1
    %347 = arith.maximumf %320, %331 : vector<1x128xf32>
    %348 = arith.maximumf %347, %342 : vector<1x128xf32>
    %349 = arith.subf %320, %348 : vector<1x128xf32>
    %350 = math.exp %349 : vector<1x128xf32>
    %351 = arith.subf %331, %348 : vector<1x128xf32>
    %352 = math.exp %351 : vector<1x128xf32>
    %353 = arith.subf %342, %348 : vector<1x128xf32>
    %354 = math.exp %353 : vector<1x128xf32>
    %355 = arith.mulf %350, %1 : vector<1x128xf32>
    %356 = arith.mulf %352, %3 : vector<1x128xf32>
    %357 = arith.addf %355, %356 : vector<1x128xf32>
    %358 = arith.mulf %354, %5 : vector<1x128xf32>
    %359 = arith.addf %357, %358 : vector<1x128xf32>
    %360 = math.log %359 : vector<1x128xf32>
    %361 = arith.addf %348, %360 : vector<1x128xf32>
    %c7 = arith.constant 7 : index
    %c0_122 = arith.constant 0 : index
    %c0_123 = arith.constant 0 : index
    %c0_124 = arith.constant 0 : index
    %362 = vector.load %arg2[%c7, %c0_122, %c0_123, %c0_124] : memref<8x5x1x128xf32, #tpu.memory_space<vmem>>, vector<1x1x1x128xf32>
    %363 = vector.shape_cast %362 : vector<1x1x1x128xf32> to vector<1x128xf32>
    %364 = arith.addf %361, %363 : vector<1x128xf32>
    %365 = arith.select %346, %364, %320 : vector<1x128xf32>
    %366 = arith.mulf %350, %7 : vector<1x128xf32>
    %367 = arith.mulf %352, %9 : vector<1x128xf32>
    %368 = arith.addf %366, %367 : vector<1x128xf32>
    %369 = arith.mulf %354, %11 : vector<1x128xf32>
    %370 = arith.addf %368, %369 : vector<1x128xf32>
    %371 = math.log %370 : vector<1x128xf32>
    %372 = arith.addf %348, %371 : vector<1x128xf32>
    %c7_125 = arith.constant 7 : index
    %c1_126 = arith.constant 1 : index
    %c0_127 = arith.constant 0 : index
    %c0_128 = arith.constant 0 : index
    %373 = vector.load %arg2[%c7_125, %c1_126, %c0_127, %c0_128] : memref<8x5x1x128xf32, #tpu.memory_space<vmem>>, vector<1x1x1x128xf32>
    %374 = vector.shape_cast %373 : vector<1x1x1x128xf32> to vector<1x128xf32>
    %375 = arith.addf %372, %374 : vector<1x128xf32>
    %376 = arith.select %346, %375, %331 : vector<1x128xf32>
    %377 = arith.mulf %350, %13 : vector<1x128xf32>
    %378 = arith.mulf %352, %15 : vector<1x128xf32>
    %379 = arith.addf %377, %378 : vector<1x128xf32>
    %380 = arith.mulf %354, %17 : vector<1x128xf32>
    %381 = arith.addf %379, %380 : vector<1x128xf32>
    %382 = math.log %381 : vector<1x128xf32>
    %383 = arith.addf %348, %382 : vector<1x128xf32>
    %c7_129 = arith.constant 7 : index
    %c2_130 = arith.constant 2 : index
    %c0_131 = arith.constant 0 : index
    %c0_132 = arith.constant 0 : index
    %384 = vector.load %arg2[%c7_129, %c2_130, %c0_131, %c0_132] : memref<8x5x1x128xf32, #tpu.memory_space<vmem>>, vector<1x1x1x128xf32>
    %385 = vector.shape_cast %384 : vector<1x1x1x128xf32> to vector<1x128xf32>
    %386 = arith.addf %383, %385 : vector<1x128xf32>
    %387 = arith.select %346, %386, %342 : vector<1x128xf32>
    %c0_133 = arith.constant 0 : index
    %c0_134 = arith.constant 0 : index
    %c0_135 = arith.constant 0 : index
    %388 = vector.load %arg6[%c0_133, %c0_134, %c0_135] : memref<3x1x128xf32, #tpu.memory_space<vmem>>, vector<1x1x128xf32>
    %389 = vector.shape_cast %388 : vector<1x1x128xf32> to vector<1x128xf32>
    %390 = vector.shape_cast %365 : vector<1x128xf32> to vector<1x1x128xf32>
    tpu.vector_store %arg6[%c0_133, %c0_134, %c0_135], %390 {strides = array<i32>} : memref<3x1x128xf32, #tpu.memory_space<vmem>>, vector<1x1x128xf32>,
    %c1_136 = arith.constant 1 : index
    %c0_137 = arith.constant 0 : index
    %c0_138 = arith.constant 0 : index
    %391 = vector.load %arg6[%c1_136, %c0_137, %c0_138] : memref<3x1x128xf32, #tpu.memory_space<vmem>>, vector<1x1x128xf32>
    %392 = vector.shape_cast %391 : vector<1x1x128xf32> to vector<1x128xf32>
    %393 = vector.shape_cast %376 : vector<1x128xf32> to vector<1x1x128xf32>
    tpu.vector_store %arg6[%c1_136, %c0_137, %c0_138], %393 {strides = array<i32>} : memref<3x1x128xf32, #tpu.memory_space<vmem>>, vector<1x1x128xf32>,
    %c2_139 = arith.constant 2 : index
    %c0_140 = arith.constant 0 : index
    %c0_141 = arith.constant 0 : index
    %394 = vector.load %arg6[%c2_139, %c0_140, %c0_141] : memref<3x1x128xf32, #tpu.memory_space<vmem>>, vector<1x1x128xf32>
    %395 = vector.shape_cast %394 : vector<1x1x128xf32> to vector<1x128xf32>
    %396 = vector.shape_cast %387 : vector<1x128xf32> to vector<1x1x128xf32>
    tpu.vector_store %arg6[%c2_139, %c0_140, %c0_141], %396 {strides = array<i32>} : memref<3x1x128xf32, #tpu.memory_space<vmem>>, vector<1x1x128xf32>,
    %c0_i32_142 = arith.constant 0 : i32
    %397 = arith.cmpi eq, %arg1, %c0_i32_142 : i32
    %398 = arith.extui %397 : i1 to i32
    %c0_i32_143 = arith.constant 0 : i32
    %399 = arith.cmpi ne, %398, %c0_i32_143 : i32
    scf.if %399 {
      %c4_144 = arith.constant 4 : index
      %c0_145 = arith.constant 0 : index
      %400 = memref.load %arg3[%c4_144, %c0_145] : memref<5x5xf32, #tpu.memory_space<smem>>
      %401 = vector.broadcast %400 : f32 to vector<1x128xf32>
      %402 = arith.addf %365, %401 : vector<1x128xf32>
      %c4_146 = arith.constant 4 : index
      %c1_147 = arith.constant 1 : index
      %403 = memref.load %arg3[%c4_146, %c1_147] : memref<5x5xf32, #tpu.memory_space<smem>>
      %404 = vector.broadcast %403 : f32 to vector<1x128xf32>
      %405 = arith.addf %376, %404 : vector<1x128xf32>
      %c4_148 = arith.constant 4 : index
      %c2_149 = arith.constant 2 : index
      %406 = memref.load %arg3[%c4_148, %c2_149] : memref<5x5xf32, #tpu.memory_space<smem>>
      %407 = vector.broadcast %406 : f32 to vector<1x128xf32>
      %408 = arith.addf %387, %407 : vector<1x128xf32>
      %409 = arith.maximumf %402, %405 : vector<1x128xf32>
      %410 = arith.maximumf %409, %408 : vector<1x128xf32>
      %411 = arith.subf %402, %410 : vector<1x128xf32>
      %412 = math.exp %411 : vector<1x128xf32>
      %413 = arith.subf %405, %410 : vector<1x128xf32>
      %414 = math.exp %413 : vector<1x128xf32>
      %415 = arith.addf %412, %414 : vector<1x128xf32>
      %416 = arith.subf %408, %410 : vector<1x128xf32>
      %417 = math.exp %416 : vector<1x128xf32>
      %418 = arith.addf %415, %417 : vector<1x128xf32>
      %419 = math.log %418 : vector<1x128xf32>
      %420 = arith.addf %410, %419 : vector<1x128xf32>
      %c0_150 = arith.constant 0 : index
      %c0_151 = arith.constant 0 : index
      %421 = vector.load %arg5[%c0_150, %c0_151] : memref<1x128xf32, #tpu.memory_space<vmem>>, vector<1x128xf32>
      tpu.vector_store %arg5[%c0_150, %c0_151], %420 {strides = array<i32>} : memref<1x128xf32, #tpu.memory_space<vmem>>, vector<1x128xf32>,
    } else {
    }
    return
  }
  func.func @transform_0(%arg0: i32, %arg1: i32) -> (i32, i32, i32, i32) {
    %c0_i32 = arith.constant 0 : i32
    %c0_i32_0 = arith.constant 0 : i32
    %c0_i32_1 = arith.constant 0 : i32
    return %arg1, %c0_i32, %arg0, %c0_i32_0 : i32, i32, i32, i32
  }
  func.func @transform_1(%arg0: i32, %arg1: i32) -> (i32, i32) {
    %c0_i32 = arith.constant 0 : i32
    %c0_i32_0 = arith.constant 0 : i32
    %c0_i32_1 = arith.constant 0 : i32
    return %c0_i32, %c0_i32_0 : i32, i32
  }
  func.func @transform_2(%arg0: i32, %arg1: i32) -> (i32, i32) {
    %c0_i32 = arith.constant 0 : i32
    %c0_i32_0 = arith.constant 0 : i32
    %c0_i32_1 = arith.constant 0 : i32
    return %c0_i32, %c0_i32_0 : i32, i32
  }
  func.func @transform_3(%arg0: i32, %arg1: i32) -> (i32, i32) {
    %c0_i32 = arith.constant 0 : i32
    %c0_i32_0 = arith.constant 0 : i32
    return %arg0, %c0_i32 : i32, i32
  }
}

</mosaic_0001>

<llo_original>
// kernel: tpu_custom_call.1
$region0: #{tpu_custom_call.1}
  #allocation0 [shape = 'u32[]', space=smem, size = 0x4, offset = 0x4, fixed_abs, tag = 'smem constant byte address 0x4 - core index']
  #allocation1 [shape = 'u32[144,128]{1,0:T(1,128)}', space=vmem, size = 0x12000, scoped, tag = 'internal scratch']
  #allocation2 [shape = 'f32[3,1,128]{2,1,0:T(1,128)}', space=vmem, size = 0x600, scoped, tag = 'scratch operand']
  %s0 = inlined_call_operand.hbm [shape: f32[8,5,1,128], index: 0, kind: input, shape index: {}]
  %s1 = inlined_call_operand.hbm [shape: f32[5,5], index: 1, kind: input, shape index: {}]
  %s2 = inlined_call_operand.hbm [shape: f32[5,5], index: 2, kind: input, shape index: {}]
  %s3 = inlined_call_operand.hbm [shape: f32[1,128], index: 3, kind: output, shape index: {}]
  %s4 = sld [smem:[#allocation0]]
  $region42: #{tpu_custom_call.1} parent=0
    _
  %s6 = ssub.s32 1, %s4
  %s7 = scalar_select 0, %s6, %s4
  $region1: #{tpu_custom_call.1} parent=0
    #allocation3 [shape = 'u8[20480]{0}', space=vmem, size = 0x5000, scoped, tag = 'input window, operand 0, single buffered']
    #allocation4 [shape = 's32[1]{0}', space=sflag, size = 0x4, scoped, tag = 'scoped memory for tpu_custom_call.1']
    #allocation5 [shape = 's32[1]{0}', space=sflag, size = 0x4, scoped, tag = 'scoped memory for tpu_custom_call.1']
    #allocation6 [shape = 's32[1]{0}', space=sflag, size = 0x4, scoped, tag = 'scoped memory for tpu_custom_call.1']
    #allocation7 [shape = 'u8[4096]{0}', space=smem, size = 0x1000, scoped, tag = 'input window, operand 1, single buffered']
    #allocation8 [shape = 'u8[4096]{0}', space=smem, size = 0x1000, scoped, tag = 'input window, operand 2, single buffered']
    #allocation9 [shape = 's32[1]{0}', space=sflag, size = 0x4, scoped, tag = 'scoped memory for tpu_custom_call.1']
    #allocation10 [shape = 'u8[512]{0}', space=vmem, size = 0x400, scoped, tag = 'output window, operand 0, single buffered']
    %8 = vsyncpa [#allocation4], 0
    %9 = vsyncpa [#allocation6], 0
    %10 = vsyncpa [#allocation9], 0
    %11 = vsyncpa [#allocation5], 0
    // Predicated region
    $region2: #{tpu_custom_call.1} parent=1 // pred_check
      _
    $region3: #{tpu_custom_call.1} parent=1 // pred_check_branch
      %13 = sbr.rel (0) target = $region5
    $region4: #{tpu_custom_call.1} parent=1 // pred_region
      %s15 = ssub.s32 640, 640
      %16 = vsyncadd [#allocation4], %s15
      %s17 = sshll.u32 [#allocation3], 4
      %s18 = int_to_ptr.vmem [resolvable:$true] %s17
      %23 = dma.hbm_to_vmem [thread:$0]  %s0, 640, %s18, [#allocation4], 16, 16, 1
    $region5: #{tpu_custom_call.1} parent=1 // pred_fallthru
      _
    // Predicated region
    $region6: #{tpu_custom_call.1} parent=1 // pred_check
      _
    $region7: #{tpu_custom_call.1} parent=1 // pred_check_branch
      %25 = sbr.rel (0) target = $region9
    $region8: #{tpu_custom_call.1} parent=1 // pred_region
      %s27 = ssub.s32 128, 128
      %28 = vsyncadd [#allocation6], %s27
      %31 = dma.hbm_to_smem %s1, 128, [#allocation7], [#allocation6]
    $region9: #{tpu_custom_call.1} parent=1 // pred_fallthru
      _
    // Predicated region
    $region10: #{tpu_custom_call.1} parent=1 // pred_check
      _
    $region11: #{tpu_custom_call.1} parent=1 // pred_check_branch
      %33 = sbr.rel (0) target = $region13
    $region12: #{tpu_custom_call.1} parent=1 // pred_region
      %s35 = ssub.s32 128, 128
      %36 = vsyncadd [#allocation9], %s35
      %39 = dma.hbm_to_smem %s2, 128, [#allocation8], [#allocation9]
    $region13: #{tpu_custom_call.1} parent=1 // pred_fallthru
      _
    // Predicated region
    $region14: #{tpu_custom_call.1} parent=1 // pred_check
      _
    $region15: #{tpu_custom_call.1} parent=1 // pred_check_branch
      %41 = sbr.rel (0) target = $region17
    $region16: #{tpu_custom_call.1} parent=1 // pred_region
      %42 = dma.done [#allocation4], 640
    $region17: #{tpu_custom_call.1} parent=1 // pred_fallthru
      _
    // Predicated region
    $region18: #{tpu_custom_call.1} parent=1 // pred_check
      _
    $region19: #{tpu_custom_call.1} parent=1 // pred_check_branch
      %44 = sbr.rel (0) target = $region21
    $region20: #{tpu_custom_call.1} parent=1 // pred_region
      %45 = dma.done [#allocation6], 128
    $region21: #{tpu_custom_call.1} parent=1 // pred_fallthru
      _
    // Predicated region
    $region22: #{tpu_custom_call.1} parent=1 // pred_check
      _
    $region23: #{tpu_custom_call.1} parent=1 // pred_check_branch
      %47 = sbr.rel (0) target = $region25
    $region24: #{tpu_custom_call.1} parent=1 // pred_region
      %48 = dma.done [#allocation9], 128
    $region25: #{tpu_custom_call.1} parent=1 // pred_fallthru
      _
    %49 = sfence
    %s50 = sld [smem:[#allocation8]]
    %v51 = vstv %s50
    %s52 = sld [smem:[#allocation8 + $0x1]]
    %v53 = vstv %s52
    %s54 = sld [smem:[#allocation8 + $0x2]]
    %v55 = vstv %s54
    %s56 = sld [smem:[#allocation8 + $0x80]]
    %v57 = vstv %s56
    %s58 = sld [smem:[#allocation8 + $0x81]]
    %v59 = vstv %s58
    %s60 = sld [smem:[#allocation8 + $0x82]]
    %v61 = vstv %s60
    %s62 = sld [smem:[#allocation8 + $0x100]]
    %v63 = vstv %s62
    %s64 = sld [smem:[#allocation8 + $0x101]]
    %v65 = vstv %s64
    %s66 = sld [smem:[#allocation8 + $0x102]]
    %v67 = vstv %s66
    %p68 = scmp.eq.s32.totalorder 0, 0
    // Predicated region
    $region26: #{tpu_custom_call.1} parent=1 // pred_check
      %p69 = pneg %p68
    $region27: #{tpu_custom_call.1} parent=1 // pred_check_branch
      %71 = sbr.rel (%p69) target = $region29
    $region28: #{tpu_custom_call.1} parent=1 // pred_region
      %v72 = vld [vmem:[#allocation3] sm:$0x1]
      %s73 = sld [smem:[#allocation7 + $0x3]]
      %v74 = vstv %s73
      %v75 = vadd.f32 %v72, %v74
      %76 = vst [vmem:[#allocation2] sm:$0x1] %v75
      %s77 = scalar_lea.vmem [#allocation3], 1
      %v78 = vld [vmem:[%s77] sm:$0x1]
      %s79 = sld [smem:[#allocation7 + $0x83]]
      %v80 = vstv %s79
      %v81 = vadd.f32 %v78, %v80
      %s82 = scalar_lea.vmem [#allocation2], 1
      %83 = vst [vmem:[%s82] sm:$0x1] %v81
      %s84 = scalar_lea.vmem [#allocation3], 2
      %v85 = vld [vmem:[%s84] sm:$0x1]
      %s86 = sld [smem:[#allocation7 + $0x103]]
      %v87 = vstv %s86
      %v88 = vadd.f32 %v85, %v87
      %s89 = scalar_lea.vmem [#allocation2], 2
      %90 = vst [vmem:[%s89] sm:$0x1] %v88
    $region29: #{tpu_custom_call.1} parent=1 // pred_fallthru
      _
    %v91 = vld [vmem:[#allocation2] sm:$0x1]
    %s92 = scalar_lea.vmem [#allocation2], 1
    %v93 = vld [vmem:[%s92] sm:$0x1]
    %s94 = scalar_lea.vmem [#allocation2], 2
    %v95 = vld [vmem:[%s94] sm:$0x1]
    %s96 = smul.u32 0, 8
    %p97 = scmp.ge.s32.totalorder %s96, 1
    %p98 = scmp.lt.s32.totalorder %s96, 8
    %p99 = pnand %p97, %p98
    %p100 = pneg %p99
    %v101 = vmax.f32 %v91, %v93
    %v102 = vmax.f32 %v101, %v95
    %v103 = vsub.f32 %v91, %v102
    %v104 = vmul.f32 %v103, 1.442695
    %v105 = vpow.pop %v104
    %v106 = vsub.f32 %v93, %v102
    %v107 = vmul.f32 %v106, 1.442695
    %v108 = vpow.pop %v107
    %v109 = vsub.f32 %v95, %v102
    %v110 = vmul.f32 %v109, 1.442695
    %v111 = vpow.pop %v110
    %v112 = vmul.f32 %v105, %v51
    %v113 = vmul.f32 %v108, %v53
    %v114 = vadd.f32 %v112, %v113
    %v115 = vmul.f32 %v111, %v55
    %v116 = vadd.f32 %v114, %v115
    %v117 = vlog2.pop %v116
    %v118 = vmul.f32 %v117, 0.6931472
    %v119 = vadd.f32 %v102, %v118
    %v120 = vld [vmem:[#allocation3] sm:$0x1]
    %v121 = vadd.f32 %v119, %v120
    %s122 = scalar_select %p100, 1, 0
    %v123 = vstv %s122
    %vm124 = vcmp.eq.s32.totalorder %v123, 1
    %v125 = vsel %vm124, %v121, %v91
    %v126 = vmul.f32 %v105, %v57
    %v127 = vmul.f32 %v108, %v59
    %v128 = vadd.f32 %v126, %v127
    %v129 = vmul.f32 %v111, %v61
    %v130 = vadd.f32 %v128, %v129
    %v131 = vlog2.pop %v130
    %v132 = vmul.f32 %v131, 0.6931472
    %v133 = vadd.f32 %v102, %v132
    %s134 = scalar_lea.vmem [#allocation3], 1
    %v135 = vld [vmem:[%s134] sm:$0x1]
    %v136 = vadd.f32 %v133, %v135
    %v137 = vsel %vm124, %v136, %v93
    %v138 = vmul.f32 %v105, %v63
    %v139 = vmul.f32 %v108, %v65
    %v140 = vadd.f32 %v138, %v139
    %v141 = vmul.f32 %v111, %v67
    %v142 = vadd.f32 %v140, %v141
    %v143 = vlog2.pop %v142
    %v144 = vmul.f32 %v143, 0.6931472
    %v145 = vadd.f32 %v102, %v144
    %s146 = scalar_lea.vmem [#allocation3], 2
    %v147 = vld [vmem:[%s146] sm:$0x1]
    %v148 = vadd.f32 %v145, %v147
    %v149 = vsel %vm124, %v148, %v95
    %s150 = sadd.s32 %s96, 1
    %p151 = scmp.ge.s32.totalorder %s150, 1
    %p152 = scmp.lt.s32.totalorder %s150, 8
    %p153 = pnand %p151, %p152
    %p154 = pneg %p153
    %v155 = vmax.f32 %v125, %v137
    %v156 = vmax.f32 %v155, %v149
    %v157 = vsub.f32 %v125, %v156
    %v158 = vmul.f32 %v157, 1.442695
    %v159 = vpow.pop %v158
    %v160 = vsub.f32 %v137, %v156
    %v161 = vmul.f32 %v160, 1.442695
    %v162 = vpow.pop %v161
    %v163 = vsub.f32 %v149, %v156
    %v164 = vmul.f32 %v163, 1.442695
    %v165 = vpow.pop %v164
    %v166 = vmul.f32 %v159, %v51
    %v167 = vmul.f32 %v162, %v53
    %v168 = vadd.f32 %v166, %v167
    %v169 = vmul.f32 %v165, %v55
    %v170 = vadd.f32 %v168, %v169
    %v171 = vlog2.pop %v170
    %v172 = vmul.f32 %v171, 0.6931472
    %v173 = vadd.f32 %v156, %v172
    %s174 = scalar_lea.vmem [#allocation3], 5
    %v175 = vld [vmem:[%s174] sm:$0x1]
    %v176 = vadd.f32 %v173, %v175
    %s177 = scalar_select %p154, 1, 0
    %v178 = vstv %s177
    %vm179 = vcmp.eq.s32.totalorder %v178, 1
    %v180 = vsel %vm179, %v176, %v125
    %v181 = vmul.f32 %v159, %v57
    %v182 = vmul.f32 %v162, %v59
    %v183 = vadd.f32 %v181, %v182
    %v184 = vmul.f32 %v165, %v61
    %v185 = vadd.f32 %v183, %v184
    %v186 = vlog2.pop %v185
    %v187 = vmul.f32 %v186, 0.6931472
    %v188 = vadd.f32 %v156, %v187
    %s189 = scalar_lea.vmem [#allocation3], 6
    %v190 = vld [vmem:[%s189] sm:$0x1]
    %v191 = vadd.f32 %v188, %v190
    %v192 = vsel %vm179, %v191, %v137
    %v193 = vmul.f32 %v159, %v63
    %v194 = vmul.f32 %v162, %v65
    %v195 = vadd.f32 %v193, %v194
    %v196 = vmul.f32 %v165, %v67
    %v197 = vadd.f32 %v195, %v196
    %v198 = vlog2.pop %v197
    %v199 = vmul.f32 %v198, 0.6931472
    %v200 = vadd.f32 %v156, %v199
    %s201 = scalar_lea.vmem [#allocation3], 7
    %v202 = vld [vmem:[%s201] sm:$0x1]
    %v203 = vadd.f32 %v200, %v202
    %v204 = vsel %vm179, %v203, %v149
    %s205 = sadd.s32 %s96, 2
    %p206 = scmp.ge.s32.totalorder %s205, 1
    %p207 = scmp.lt.s32.totalorder %s205, 8
    %p208 = pnand %p206, %p207
    %p209 = pneg %p208
    %v210 = vmax.f32 %v180, %v192
    %v211 = vmax.f32 %v210, %v204
    %v212 = vsub.f32 %v180, %v211
    %v213 = vmul.f32 %v212, 1.442695
    %v214 = vpow.pop %v213
    %v215 = vsub.f32 %v192, %v211
    %v216 = vmul.f32 %v215, 1.442695
    %v217 = vpow.pop %v216
    %v218 = vsub.f32 %v204, %v211
    %v219 = vmul.f32 %v218, 1.442695
    %v220 = vpow.pop %v219
    %v221 = vmul.f32 %v214, %v51
    %v222 = vmul.f32 %v217, %v53
    %v223 = vadd.f32 %v221, %v222
    %v224 = vmul.f32 %v220, %v55
    %v225 = vadd.f32 %v223, %v224
    %v226 = vlog2.pop %v225
    %v227 = vmul.f32 %v226, 0.6931472
    %v228 = vadd.f32 %v211, %v227
    %s229 = scalar_lea.vmem [#allocation3], 10
    %v230 = vld [vmem:[%s229] sm:$0x1]
    %v231 = vadd.f32 %v228, %v230
    %s232 = scalar_select %p209, 1, 0
    %v233 = vstv %s232
    %vm234 = vcmp.eq.s32.totalorder %v233, 1
    %v235 = vsel %vm234, %v231, %v180
    %v236 = vmul.f32 %v214, %v57
    %v237 = vmul.f32 %v217, %v59
    %v238 = vadd.f32 %v236, %v237
    %v239 = vmul.f32 %v220, %v61
    %v240 = vadd.f32 %v238, %v239
    %v241 = vlog2.pop %v240
    %v242 = vmul.f32 %v241, 0.6931472
    %v243 = vadd.f32 %v211, %v242
    %s244 = scalar_lea.vmem [#allocation3], 11
    %v245 = vld [vmem:[%s244] sm:$0x1]
    %v246 = vadd.f32 %v243, %v245
    %v247 = vsel %vm234, %v246, %v192
    %v248 = vmul.f32 %v214, %v63
    %v249 = vmul.f32 %v217, %v65
    %v250 = vadd.f32 %v248, %v249
    %v251 = vmul.f32 %v220, %v67
    %v252 = vadd.f32 %v250, %v251
    %v253 = vlog2.pop %v252
    %v254 = vmul.f32 %v253, 0.6931472
    %v255 = vadd.f32 %v211, %v254
    %s256 = scalar_lea.vmem [#allocation3], 12
    %v257 = vld [vmem:[%s256] sm:$0x1]
    %v258 = vadd.f32 %v255, %v257
    %v259 = vsel %vm234, %v258, %v204
    %s260 = sadd.s32 %s96, 3
    %p261 = scmp.ge.s32.totalorder %s260, 1
    %p262 = scmp.lt.s32.totalorder %s260, 8
    %p263 = pnand %p261, %p262
    %p264 = pneg %p263
    %v265 = vmax.f32 %v235, %v247
    %v266 = vmax.f32 %v265, %v259
    %v267 = vsub.f32 %v235, %v266
    %v268 = vmul.f32 %v267, 1.442695
    %v269 = vpow.pop %v268
    %v270 = vsub.f32 %v247, %v266
    %v271 = vmul.f32 %v270, 1.442695
    %v272 = vpow.pop %v271
    %v273 = vsub.f32 %v259, %v266
    %v274 = vmul.f32 %v273, 1.442695
    %v275 = vpow.pop %v274
    %v276 = vmul.f32 %v269, %v51
    %v277 = vmul.f32 %v272, %v53
    %v278 = vadd.f32 %v276, %v277
    %v279 = vmul.f32 %v275, %v55
    %v280 = vadd.f32 %v278, %v279
    %v281 = vlog2.pop %v280
    %v282 = vmul.f32 %v281, 0.6931472
    %v283 = vadd.f32 %v266, %v282
    %s284 = scalar_lea.vmem [#allocation3], 15
    %v285 = vld [vmem:[%s284] sm:$0x1]
    %v286 = vadd.f32 %v283, %v285
    %s287 = scalar_select %p264, 1, 0
    %v288 = vstv %s287
    %vm289 = vcmp.eq.s32.totalorder %v288, 1
    %v290 = vsel %vm289, %v286, %v235
    %v291 = vmul.f32 %v269, %v57
    %v292 = vmul.f32 %v272, %v59
    %v293 = vadd.f32 %v291, %v292
    %v294 = vmul.f32 %v275, %v61
    %v295 = vadd.f32 %v293, %v294
    %v296 = vlog2.pop %v295
    %v297 = vmul.f32 %v296, 0.6931472
    %v298 = vadd.f32 %v266, %v297
    %s299 = scalar_lea.vmem [#allocation3], 16
    %v300 = vld [vmem:[%s299] sm:$0x1]
    %v301 = vadd.f32 %v298, %v300
    %v302 = vsel %vm289, %v301, %v247
    %v303 = vmul.f32 %v269, %v63
    %v304 = vmul.f32 %v272, %v65
    %v305 = vadd.f32 %v303, %v304
    %v306 = vmul.f32 %v275, %v67
    %v307 = vadd.f32 %v305, %v306
    %v308 = vlog2.pop %v307
    %v309 = vmul.f32 %v308, 0.6931472
    %v310 = vadd.f32 %v266, %v309
    %s311 = scalar_lea.vmem [#allocation3], 17
    %v312 = vld [vmem:[%s311] sm:$0x1]
    %v313 = vadd.f32 %v310, %v312
    %v314 = vsel %vm289, %v313, %v259
    %s315 = sadd.s32 %s96, 4
    %p316 = scmp.ge.s32.totalorder %s315, 1
    %p317 = scmp.lt.s32.totalorder %s315, 8
    %p318 = pnand %p316, %p317
    %p319 = pneg %p318
    %v320 = vmax.f32 %v290, %v302
    %v321 = vmax.f32 %v320, %v314
    %v322 = vsub.f32 %v290, %v321
    %v323 = vmul.f32 %v322, 1.442695
    %v324 = vpow.pop %v323
    %v325 = vsub.f32 %v302, %v321
    %v326 = vmul.f32 %v325, 1.442695
    %v327 = vpow.pop %v326
    %v328 = vsub.f32 %v314, %v321
    %v329 = vmul.f32 %v328, 1.442695
    %v330 = vpow.pop %v329
    %v331 = vmul.f32 %v324, %v51
    %v332 = vmul.f32 %v327, %v53
    %v333 = vadd.f32 %v331, %v332
    %v334 = vmul.f32 %v330, %v55
    %v335 = vadd.f32 %v333, %v334
    %v336 = vlog2.pop %v335
    %v337 = vmul.f32 %v336, 0.6931472
    %v338 = vadd.f32 %v321, %v337
    %s339 = scalar_lea.vmem [#allocation3], 20
    %v340 = vld [vmem:[%s339] sm:$0x1]
    %v341 = vadd.f32 %v338, %v340
    %s342 = scalar_select %p319, 1, 0
    %v343 = vstv %s342
    %vm344 = vcmp.eq.s32.totalorder %v343, 1
    %v345 = vsel %vm344, %v341, %v290
    %v346 = vmul.f32 %v324, %v57
    %v347 = vmul.f32 %v327, %v59
    %v348 = vadd.f32 %v346, %v347
    %v349 = vmul.f32 %v330, %v61
    %v350 = vadd.f32 %v348, %v349
    %v351 = vlog2.pop %v350
    %v352 = vmul.f32 %v351, 0.6931472
    %v353 = vadd.f32 %v321, %v352
    %s354 = scalar_lea.vmem [#allocation3], 21
    %v355 = vld [vmem:[%s354] sm:$0x1]
    %v356 = vadd.f32 %v353, %v355
    %v357 = vsel %vm344, %v356, %v302
    %v358 = vmul.f32 %v324, %v63
    %v359 = vmul.f32 %v327, %v65
    %v360 = vadd.f32 %v358, %v359
    %v361 = vmul.f32 %v330, %v67
    %v362 = vadd.f32 %v360, %v361
    %v363 = vlog2.pop %v362
    %v364 = vmul.f32 %v363, 0.6931472
    %v365 = vadd.f32 %v321, %v364
    %s366 = scalar_lea.vmem [#allocation3], 22
    %v367 = vld [vmem:[%s366] sm:$0x1]
    %v368 = vadd.f32 %v365, %v367
    %v369 = vsel %vm344, %v368, %v314
    %s370 = sadd.s32 %s96, 5
    %p371 = scmp.ge.s32.totalorder %s370, 1
    %p372 = scmp.lt.s32.totalorder %s370, 8
    %p373 = pnand %p371, %p372
    %p374 = pneg %p373
    %v375 = vmax.f32 %v345, %v357
    %v376 = vmax.f32 %v375, %v369
    %v377 = vsub.f32 %v345, %v376
    %v378 = vmul.f32 %v377, 1.442695
    %v379 = vpow.pop %v378
    %v380 = vsub.f32 %v357, %v376
    %v381 = vmul.f32 %v380, 1.442695
    %v382 = vpow.pop %v381
    %v383 = vsub.f32 %v369, %v376
    %v384 = vmul.f32 %v383, 1.442695
    %v385 = vpow.pop %v384
    %v386 = vmul.f32 %v379, %v51
    %v387 = vmul.f32 %v382, %v53
    %v388 = vadd.f32 %v386, %v387
    %v389 = vmul.f32 %v385, %v55
    %v390 = vadd.f32 %v388, %v389
    %v391 = vlog2.pop %v390
    %v392 = vmul.f32 %v391, 0.6931472
    %v393 = vadd.f32 %v376, %v392
    %s394 = scalar_lea.vmem [#allocation3], 25
    %v395 = vld [vmem:[%s394] sm:$0x1]
    %v396 = vadd.f32 %v393, %v395
    %s397 = scalar_select %p374, 1, 0
    %v398 = vstv %s397
    %vm399 = vcmp.eq.s32.totalorder %v398, 1
    %v400 = vsel %vm399, %v396, %v345
    %v401 = vmul.f32 %v379, %v57
    %v402 = vmul.f32 %v382, %v59
    %v403 = vadd.f32 %v401, %v402
    %v404 = vmul.f32 %v385, %v61
    %v405 = vadd.f32 %v403, %v404
    %v406 = vlog2.pop %v405
    %v407 = vmul.f32 %v406, 0.6931472
    %v408 = vadd.f32 %v376, %v407
    %s409 = scalar_lea.vmem [#allocation3], 26
    %v410 = vld [vmem:[%s409] sm:$0x1]
    %v411 = vadd.f32 %v408, %v410
    %v412 = vsel %vm399, %v411, %v357
    %v413 = vmul.f32 %v379, %v63
    %v414 = vmul.f32 %v382, %v65
    %v415 = vadd.f32 %v413, %v414
    %v416 = vmul.f32 %v385, %v67
    %v417 = vadd.f32 %v415, %v416
    %v418 = vlog2.pop %v417
    %v419 = vmul.f32 %v418, 0.6931472
    %v420 = vadd.f32 %v376, %v419
    %s421 = scalar_lea.vmem [#allocation3], 27
    %v422 = vld [vmem:[%s421] sm:$0x1]
    %v423 = vadd.f32 %v420, %v422
    %v424 = vsel %vm399, %v423, %v369
    %s425 = sadd.s32 %s96, 6
    %p426 = scmp.ge.s32.totalorder %s425, 1
    %p427 = scmp.lt.s32.totalorder %s425, 8
    %p428 = pnand %p426, %p427
    %p429 = pneg %p428
    %v430 = vmax.f32 %v400, %v412
    %v431 = vmax.f32 %v430, %v424
    %v432 = vsub.f32 %v400, %v431
    %v433 = vmul.f32 %v432, 1.442695
    %v434 = vpow.pop %v433
    %v435 = vsub.f32 %v412, %v431
    %v436 = vmul.f32 %v435, 1.442695
    %v437 = vpow.pop %v436
    %v438 = vsub.f32 %v424, %v431
    %v439 = vmul.f32 %v438, 1.442695
    %v440 = vpow.pop %v439
    %v441 = vmul.f32 %v434, %v51
    %v442 = vmul.f32 %v437, %v53
    %v443 = vadd.f32 %v441, %v442
    %v444 = vmul.f32 %v440, %v55
    %v445 = vadd.f32 %v443, %v444
    %v446 = vlog2.pop %v445
    %v447 = vmul.f32 %v446, 0.6931472
    %v448 = vadd.f32 %v431, %v447
    %s449 = scalar_lea.vmem [#allocation3], 30
    %v450 = vld [vmem:[%s449] sm:$0x1]
    %v451 = vadd.f32 %v448, %v450
    %s452 = scalar_select %p429, 1, 0
    %v453 = vstv %s452
    %vm454 = vcmp.eq.s32.totalorder %v453, 1
    %v455 = vsel %vm454, %v451, %v400
    %v456 = vmul.f32 %v434, %v57
    %v457 = vmul.f32 %v437, %v59
    %v458 = vadd.f32 %v456, %v457
    %v459 = vmul.f32 %v440, %v61
    %v460 = vadd.f32 %v458, %v459
    %v461 = vlog2.pop %v460
    %v462 = vmul.f32 %v461, 0.6931472
    %v463 = vadd.f32 %v431, %v462
    %s464 = scalar_lea.vmem [#allocation3], 31
    %v465 = vld [vmem:[%s464] sm:$0x1]
    %v466 = vadd.f32 %v463, %v465
    %v467 = vsel %vm454, %v466, %v412
    %v468 = vmul.f32 %v434, %v63
    %v469 = vmul.f32 %v437, %v65
    %v470 = vadd.f32 %v468, %v469
    %v471 = vmul.f32 %v440, %v67
    %v472 = vadd.f32 %v470, %v471
    %v473 = vlog2.pop %v472
    %v474 = vmul.f32 %v473, 0.6931472
    %v475 = vadd.f32 %v431, %v474
    %s476 = scalar_lea.vmem [#allocation3], 32
    %v477 = vld [vmem:[%s476] sm:$0x1]
    %v478 = vadd.f32 %v475, %v477
    %v479 = vsel %vm454, %v478, %v424
    %s480 = sadd.s32 %s96, 7
    %p481 = scmp.ge.s32.totalorder %s480, 1
    %p482 = scmp.lt.s32.totalorder %s480, 8
    %p483 = pnand %p481, %p482
    %p484 = pneg %p483
    %v485 = vmax.f32 %v455, %v467
    %v486 = vmax.f32 %v485, %v479
    %v487 = vsub.f32 %v455, %v486
    %v488 = vmul.f32 %v487, 1.442695
    %v489 = vpow.pop %v488
    %v490 = vsub.f32 %v467, %v486
    %v491 = vmul.f32 %v490, 1.442695
    %v492 = vpow.pop %v491
    %v493 = vsub.f32 %v479, %v486
    %v494 = vmul.f32 %v493, 1.442695
    %v495 = vpow.pop %v494
    %v496 = vmul.f32 %v489, %v51
    %v497 = vmul.f32 %v492, %v53
    %v498 = vadd.f32 %v496, %v497
    %v499 = vmul.f32 %v495, %v55
    %v500 = vadd.f32 %v498, %v499
    %v501 = vlog2.pop %v500
    %v502 = vmul.f32 %v501, 0.6931472
    %v503 = vadd.f32 %v486, %v502
    %s504 = scalar_lea.vmem [#allocation3], 35
    %v505 = vld [vmem:[%s504] sm:$0x1]
    %v506 = vadd.f32 %v503, %v505
    %s507 = scalar_select %p484, 1, 0
    %v508 = vstv %s507
    %vm509 = vcmp.eq.s32.totalorder %v508, 1
    %v510 = vsel %vm509, %v506, %v455
    %v511 = vmul.f32 %v489, %v57
    %v512 = vmul.f32 %v492, %v59
    %v513 = vadd.f32 %v511, %v512
    %v514 = vmul.f32 %v495, %v61
    %v515 = vadd.f32 %v513, %v514
    %v516 = vlog2.pop %v515
    %v517 = vmul.f32 %v516, 0.6931472
    %v518 = vadd.f32 %v486, %v517
    %s519 = scalar_lea.vmem [#allocation3], 36
    %v520 = vld [vmem:[%s519] sm:$0x1]
    %v521 = vadd.f32 %v518, %v520
    %v522 = vsel %vm509, %v521, %v467
    %v523 = vmul.f32 %v489, %v63
    %v524 = vmul.f32 %v492, %v65
    %v525 = vadd.f32 %v523, %v524
    %v526 = vmul.f32 %v495, %v67
    %v527 = vadd.f32 %v525, %v526
    %v528 = vlog2.pop %v527
    %v529 = vmul.f32 %v528, 0.6931472
    %v530 = vadd.f32 %v486, %v529
    %s531 = scalar_lea.vmem [#allocation3], 37
    %v532 = vld [vmem:[%s531] sm:$0x1]
    %v533 = vadd.f32 %v530, %v532
    %v534 = vsel %vm509, %v533, %v479
    %535 = vst [vmem:[#allocation2] sm:$0x1] %v510
    %536 = vst [vmem:[%s92] sm:$0x1] %v522
    %537 = vst [vmem:[%s94] sm:$0x1] %v534
    // Predicated region
    $region30: #{tpu_custom_call.1} parent=1 // pred_check
      %p538 = pneg %p68
    $region31: #{tpu_custom_call.1} parent=1 // pred_check_branch
      %540 = sbr.rel (%p538) target = $region33
    $region32: #{tpu_custom_call.1} parent=1 // pred_region
      %s541 = sld [smem:[#allocation7 + $0x200]]
      %v542 = vstv %s541
      %v543 = vadd.f32 %v510, %v542
      %s544 = sld [smem:[#allocation7 + $0x201]]
      %v545 = vstv %s544
      %v546 = vadd.f32 %v522, %v545
      %s547 = sld [smem:[#allocation7 + $0x202]]
      %v548 = vstv %s547
      %v549 = vadd.f32 %v534, %v548
      %v550 = vmax.f32 %v543, %v546
      %v551 = vmax.f32 %v550, %v549
      %v552 = vsub.f32 %v543, %v551
      %v553 = vmul.f32 %v552, 1.442695
      %v554 = vpow.pop %v553
      %v555 = vsub.f32 %v546, %v551
      %v556 = vmul.f32 %v555, 1.442695
      %v557 = vpow.pop %v556
      %v558 = vadd.f32 %v554, %v557
      %v559 = vsub.f32 %v549, %v551
      %v560 = vmul.f32 %v559, 1.442695
      %v561 = vpow.pop %v560
      %v562 = vadd.f32 %v558, %v561
      %v563 = vlog2.pop %v562
      %v564 = vmul.f32 %v563, 0.6931472
      %v565 = vadd.f32 %v551, %v564
      %566 = vst [vmem:[#allocation10] sm:$0x1] %v565
    $region33: #{tpu_custom_call.1} parent=1 // pred_fallthru
      _
    // Predicated region
    $region34: #{tpu_custom_call.1} parent=1 // pred_check
      _
    $region35: #{tpu_custom_call.1} parent=1 // pred_check_branch
      %568 = sbr.rel (0) target = $region37
    $region36: #{tpu_custom_call.1} parent=1 // pred_region
      %s570 = ssub.s32 16, 16
      %571 = vsyncadd [#allocation5], %s570
      %s573 = sshll.u32 [#allocation10], 4
      %s574 = int_to_ptr.vmem [resolvable:$true] %s573
      %576 = dma.vmem_to_hbm [thread:$0]  %s574, 16, %s3, [#allocation5]
    $region37: #{tpu_custom_call.1} parent=1 // pred_fallthru
      _
    // Predicated region
    $region38: #{tpu_custom_call.1} parent=1 // pred_check
      _
    $region39: #{tpu_custom_call.1} parent=1 // pred_check_branch
      %578 = sbr.rel (0) target = $region41
    $region40: #{tpu_custom_call.1} parent=1 // pred_region
      %579 = dma.done [#allocation5], 16
    $region41: #{tpu_custom_call.1} parent=1 // pred_fallthru
      _
    %580 = vsyncpa [#allocation4], 1
    %581 = vsyncpa [#allocation5], 1
    %582 = vsyncpa [#allocation6], 1
    %583 = vsyncpa [#allocation9], 1

</llo_original>
